<compile_context>
chip_gen: v7x
topology: tpu7x:2x2x1
jax: 0.10.0
libtpu: 0.0.40
codegen_flags: <defaults>
</compile_context>

<pallas_src>
import jax
import jax.numpy as jnp
from jax.experimental import pallas as pl
from jax.experimental.pallas import tpu as pltpu


def _round_up(n, m):
    return (n + m - 1) // m * m


def _mish(x):
    # mish(x) = x * tanh(softplus(x)) = x * (t - 1) / (t + 1),  t = (1 + e^x)^2
    # Single EUP exp + approximate reciprocal instead of exp + log1p + tanh.
    e = jnp.exp(jnp.minimum(x, 20.0))   # clamp: for x > 20, (t-1)/(t+1) == 1 in f32
    t = (1.0 + e) * (1.0 + e)
    return x * (t - 1.0) * pl.reciprocal(t + 1.0, approx=True)


def _bn_mish(h, gamma, beta, n_real, inv_n, eps=1e-5):
    # PyTorch BatchNorm1d default train mode (biased batch stats), computed in
    # one f32 pass (sum + sum-of-squares) restricted to the real batch rows.
    row = jax.lax.broadcasted_iota(jnp.int32, h.shape, 0)
    mask = (row < n_real).astype(h.dtype)
    hm = h * mask
    mean = jnp.sum(hm, axis=0, keepdims=True) * inv_n
    var = jnp.sum(hm * h, axis=0, keepdims=True) * inv_n - mean * mean
    var = jnp.maximum(var, 0.0)          # guard tiny negative from cancellation
    y = (h - mean) * jax.lax.rsqrt(var + eps) * gamma + beta
    return _mish(y)


def head_forward(x, params):
    (w1, b1, g1, be1, w2, b2, g2, be2, w3, b3) = params
    B, C, H, W = x.shape
    HW = H * W
    c1, c2, nc = w1.shape[1], w2.shape[1], w3.shape[1]

    # ---- padded / tiled sizes ------------------------------------------------
    B_pad = _round_up(B, 8)                          # f32 sublane height for matmul M
    c_tile = 256 if C >= 256 else _round_up(C, 8)    # channel (fc1-K) streaming tile
    C_pad = _round_up(C, c_tile)
    c1_pad = _round_up(c1, 128)                      # lane-dense hidden dims
    c2_pad = _round_up(c2, 128)
    nc_pad = _round_up(nc, 128)                      # lane-dense output stores

    # Big activation: native dtype, just a reshape unless padding is required.
    x_flat = x.reshape(B, C, HW)
    if B_pad != B or C_pad != C:
        x_flat = jnp.pad(x_flat, ((0, B_pad - B), (0, C_pad - C), (0, 0)))

    def pad2(a, rows, cols):
        return jnp.pad(a, ((0, rows - a.shape[0]), (0, cols - a.shape[1])))

    w1p = pad2(w1, C_pad, c1_pad)
    b1p = pad2(b1, 1, c1_pad)
    g1p = pad2(g1, 1, c1_pad)
    be1p = pad2(be1, 1, c1_pad)
    w2p = pad2(w2, c1_pad, c2_pad)
    b2p = pad2(b2, 1, c2_pad)
    g2p = pad2(g2, 1, c2_pad)
    be2p = pad2(be2, 1, c2_pad)
    w3p = pad2(w3, c2_pad, nc_pad)
    b3p = pad2(b3, 1, nc_pad)

    inv_hw = 1.0 / HW
    inv_b = 1.0 / B
    n_k = C_pad // c_tile

    def kernel(x_ref, w1_ref, b1_ref, g1_ref, be1_ref,
               w2_ref, b2_ref, g2_ref, be2_ref, w3_ref, b3_ref,
               out_ref, acc_ref):
        k = pl.program_id(0)

        @pl.when(k == 0)
        def _():
            acc_ref[...] = jnp.zeros_like(acc_ref)

        # AdaptiveAvgPool2d(1): mean over the spatial axis of this channel tile.
        # (Kernel is HBM-bound on streaming x; the cross-lane reduce rides in
        #  XLU slack, which is why we avoid a wrapper-side transpose copy.)
        pooled = jnp.sum(x_ref[...].astype(jnp.float32), axis=-1) * inv_hw

        # Partial fc1 product for this channel (K) slice, accumulated in f32.
        acc_ref[...] += jnp.dot(pooled, w1_ref[...],
                                preferred_element_type=jnp.float32)

        @pl.when(k == n_k - 1)
        def _():
            h1 = acc_ref[...] + b1_ref[...]
            h1 = _bn_mish(h1, g1_ref[...], be1_ref[...], B, inv_b)
            h2 = jnp.dot(h1, w2_ref[...],
                         preferred_element_type=jnp.float32) + b2_ref[...]
            h2 = _bn_mish(h2, g2_ref[...], be2_ref[...], B, inv_b)
            out_ref[...] = jnp.dot(h2, w3_ref[...],
                                   preferred_element_type=jnp.float32) + b3_ref[...]

    def const2(shape):
        # Constant index map => block stays VMEM-resident across grid steps.
        return pl.BlockSpec(shape, lambda k: (0, 0))

    out = pl.pallas_call(
        kernel,
        out_shape=jax.ShapeDtypeStruct((B_pad, nc_pad), jnp.float32),
        grid_spec=pltpu.PrefetchScalarGridSpec(
            num_scalar_prefetch=0,
            grid=(n_k,),
            in_specs=[
                pl.BlockSpec((B_pad, c_tile, HW), lambda k: (0, k, 0)),  # x (streamed)
                pl.BlockSpec((c_tile, c1_pad), lambda k: (k, 0)),        # w1 K-slice
                const2((1, c1_pad)), const2((1, c1_pad)), const2((1, c1_pad)),
                const2((c1_pad, c2_pad)),
                const2((1, c2_pad)), const2((1, c2_pad)), const2((1, c2_pad)),
                const2((c2_pad, nc_pad)),
                const2((1, nc_pad)),
            ],
            out_specs=pl.BlockSpec((B_pad, nc_pad), lambda k: (0, 0)),
            scratch_shapes=[pltpu.VMEM((B_pad, c1_pad), jnp.float32)],
        ),
        compiler_params=pltpu.CompilerParams(
            dimension_semantics=("arbitrary",),        # K-reduction axis
            vmem_limit_bytes=48 * 1024 * 1024,         # headroom under v7x 64 MiB
        ),
    )(x_flat, w1p, b1p, g1p, be1p, w2p, b2p, g2p, be2p, w3p, b3p)

    return out[:B, :nc]


def init_params(key, num_channels, num_classes):
    c1, c2 = num_channels // 2, num_channels // 4
    ks = jax.random.split(key, 3)

    def lin(k, fan_in, fan_out):
        kw, kb = jax.random.split(k)
        bound = 1.0 / jnp.sqrt(fan_in)
        # Linear weights stored transposed: (in_features, out_features).
        w = jax.random.uniform(kw, (fan_in, fan_out), jnp.float32, -bound, bound)
        b = jax.random.uniform(kb, (1, fan_out), jnp.float32, -bound, bound)
        return w, b

    w1, b1 = lin(ks[0], num_channels, c1)
    w2, b2 = lin(ks[1], c1, c2)
    w3, b3 = lin(ks[2], c2, num_classes)
    # BatchNorm1d default init: gamma=1, beta=0 (kept as (1, F) rows).
    g1, be1 = jnp.ones((1, c1), jnp.float32), jnp.zeros((1, c1), jnp.float32)
    g2, be2 = jnp.ones((1, c2), jnp.float32), jnp.zeros((1, c2), jnp.float32)
    return (w1, b1, g1, be1, w2, b2, g2, be2, w3, b3)


if __name__ == "__main__":
    B, C, H, W = 2, 32, 16, 16
    num_classes = 10

    key = jax.random.PRNGKey(0)
    kx, kp = jax.random.split(key)
    x = jax.random.normal(kx, (B, C, H, W), jnp.float32)
    params = init_params(kp, C, num_classes)

    out = head_forward(x, params)
    jax.block_until_ready(out)
    assert out.shape == (B, num_classes)
    assert bool(jnp.all(jnp.isfinite(out)))
    print("KERNEL_OK")
</pallas_src>

<mosaic_0001>
module attributes {stable_mosaic.version = 11 : i64} {
  func.func @kernel(%arg0: i32, %arg1: memref<8x32x256xf32, #tpu.memory_space<vmem>>, %arg2: memref<32x128xf32, #tpu.memory_space<vmem>>, %arg3: memref<1x128xf32, #tpu.memory_space<vmem>>, %arg4: memref<1x128xf32, #tpu.memory_space<vmem>>, %arg5: memref<1x128xf32, #tpu.memory_space<vmem>>, %arg6: memref<128x128xf32, #tpu.memory_space<vmem>>, %arg7: memref<1x128xf32, #tpu.memory_space<vmem>>, %arg8: memref<1x128xf32, #tpu.memory_space<vmem>>, %arg9: memref<1x128xf32, #tpu.memory_space<vmem>>, %arg10: memref<128x128xf32, #tpu.memory_space<vmem>>, %arg11: memref<1x128xf32, #tpu.memory_space<vmem>>, %arg12: memref<8x128xf32, #tpu.memory_space<vmem>>, %arg13: memref<8x128xf32, #tpu.memory_space<vmem>>) attributes {dimension_semantics = [#tpu.dimension_semantics<arbitrary>], iteration_bounds = array<i64: 1>, scalar_prefetch = 0 : i64, scratch_operands = 1 : i64, tpu.core_type = #tpu.core_type<tc>, window_params = [{transform_indices = @transform_0, window_bounds = array<i64: 8, 32, 256>}, {transform_indices = @transform_1, window_bounds = array<i64: 32, 128>}, {pipeline_mode = #tpu.pipeline_mode<synchronous>, transform_indices = @transform_2, window_bounds = array<i64: 1, 128>}, {pipeline_mode = #tpu.pipeline_mode<synchronous>, transform_indices = @transform_3, window_bounds = array<i64: 1, 128>}, {pipeline_mode = #tpu.pipeline_mode<synchronous>, transform_indices = @transform_4, window_bounds = array<i64: 1, 128>}, {pipeline_mode = #tpu.pipeline_mode<synchronous>, transform_indices = @transform_5, window_bounds = array<i64: 128, 128>}, {pipeline_mode = #tpu.pipeline_mode<synchronous>, transform_indices = @transform_6, window_bounds = array<i64: 1, 128>}, {pipeline_mode = #tpu.pipeline_mode<synchronous>, transform_indices = @transform_7, window_bounds = array<i64: 1, 128>}, {pipeline_mode = #tpu.pipeline_mode<synchronous>, transform_indices = @transform_8, window_bounds = array<i64: 1, 128>}, {pipeline_mode = #tpu.pipeline_mode<synchronous>, transform_indices = @transform_9, window_bounds = array<i64: 128, 128>}, {pipeline_mode = #tpu.pipeline_mode<synchronous>, transform_indices = @transform_10, window_bounds = array<i64: 1, 128>}, {pipeline_mode = #tpu.pipeline_mode<synchronous>, transform_indices = @transform_11, window_bounds = array<i64: 8, 128>}]} {
    %c0_i32 = arith.constant 0 : i32
    %0 = arith.cmpi eq, %arg0, %c0_i32 : i32
    %1 = arith.extui %0 : i1 to i32
    %c0_i32_0 = arith.constant 0 : i32
    %2 = arith.cmpi ne, %1, %c0_i32_0 : i32
    scf.if %2 {
      %cst_13 = arith.constant 0.000000e+00 : f32
      %15 = vector.broadcast %cst_13 : f32 to vector<8x128xf32>
      %c0_14 = arith.constant 0 : index
      %c0_15 = arith.constant 0 : index
      %16 = vector.load %arg13[%c0_14, %c0_15] : memref<8x128xf32, #tpu.memory_space<vmem>>, vector<8x128xf32>
      tpu.vector_store %arg13[%c0_14, %c0_15], %15 {strides = array<i32>} : memref<8x128xf32, #tpu.memory_space<vmem>>, vector<8x128xf32>,
    } else {
    }
    %c0 = arith.constant 0 : index
    %c0_1 = arith.constant 0 : index
    %c0_2 = arith.constant 0 : index
    %3 = vector.load %arg1[%c0, %c0_1, %c0_2] : memref<8x32x256xf32, #tpu.memory_space<vmem>>, vector<8x32x256xf32>
    %cst = arith.constant dense<0.000000e+00> : vector<8x32xf32>
    %4 = vector.multi_reduction <add>, %3, %cst [2] : vector<8x32x256xf32> to vector<8x32xf32>
    %cst_3 = arith.constant 3.906250e-03 : f32
    %5 = vector.broadcast %cst_3 : f32 to vector<8x32xf32>
    %6 = arith.mulf %4, %5 : vector<8x32xf32>
    %c0_4 = arith.constant 0 : index
    %c0_5 = arith.constant 0 : index
    %7 = vector.load %arg13[%c0_4, %c0_5] : memref<8x128xf32, #tpu.memory_space<vmem>>, vector<8x128xf32>
    %c0_6 = arith.constant 0 : index
    %c0_7 = arith.constant 0 : index
    %8 = vector.load %arg2[%c0_6, %c0_7] : memref<32x128xf32, #tpu.memory_space<vmem>>, vector<32x128xf32>
    %cst_8 = arith.constant dense<0.000000e+00> : vector<8x128xf32>
    %9 = tpu.matmul %6, %8, %cst_8 {dimension_numbers = #tpu.dot_dimension_numbers<[1], [0], [0], [1], [0, 0, 1, 1], [], []>} : vector<8x32xf32>, vector<32x128xf32>, vector<8x128xf32> -> vector<8x128xf32>
    %10 = arith.addf %7, %9 : vector<8x128xf32>
    %c0_9 = arith.constant 0 : index
    %c0_10 = arith.constant 0 : index
    %11 = vector.load %arg13[%c0_9, %c0_10] : memref<8x128xf32, #tpu.memory_space<vmem>>, vector<8x128xf32>
    tpu.vector_store %arg13[%c0_9, %c0_10], %10 {strides = array<i32>} : memref<8x128xf32, #tpu.memory_space<vmem>>, vector<8x128xf32>,
    %c0_i32_11 = arith.constant 0 : i32
    %12 = arith.cmpi eq, %arg0, %c0_i32_11 : i32
    %13 = arith.extui %12 : i1 to i32
    %c0_i32_12 = arith.constant 0 : i32
    %14 = arith.cmpi ne, %13, %c0_i32_12 : i32
    scf.if %14 {
      %c0_13 = arith.constant 0 : index
      %c0_14 = arith.constant 0 : index
      %15 = vector.load %arg13[%c0_13, %c0_14] : memref<8x128xf32, #tpu.memory_space<vmem>>, vector<8x128xf32>
      %c0_15 = arith.constant 0 : index
      %c0_16 = arith.constant 0 : index
      %16 = vector.load %arg3[%c0_15, %c0_16] : memref<1x128xf32, #tpu.memory_space<vmem>>, vector<1x128xf32>
      %17 = vector.broadcast %16 : vector<1x128xf32> to vector<8x128xf32>
      %18 = arith.addf %15, %17 : vector<8x128xf32>
      %c0_17 = arith.constant 0 : index
      %c0_18 = arith.constant 0 : index
      %19 = vector.load %arg4[%c0_17, %c0_18] : memref<1x128xf32, #tpu.memory_space<vmem>>, vector<1x128xf32>
      %c0_19 = arith.constant 0 : index
      %c0_20 = arith.constant 0 : index
      %20 = vector.load %arg5[%c0_19, %c0_20] : memref<1x128xf32, #tpu.memory_space<vmem>>, vector<1x128xf32>
      %21 = tpu.iota {dimensions = array<i32: 0>} : vector<8x128xi32>
      %c2_i32 = arith.constant 2 : i32
      %22 = vector.broadcast %c2_i32 : i32 to vector<8x128xi32>
      %23 = arith.cmpi slt, %21, %22 : vector<8x128xi32>
      %24 = arith.extui %23 : vector<8x128xi1> to vector<8x128xi32>
      %25 = arith.sitofp %24 : vector<8x128xi32> to vector<8x128xf32>
      %26 = arith.mulf %18, %25 : vector<8x128xf32>
      %cst_21 = arith.constant dense<0.000000e+00> : vector<128xf32>
      %27 = vector.multi_reduction <add>, %26, %cst_21 [0] : vector<8x128xf32> to vector<128xf32>
      %28 = vector.shape_cast %27 : vector<128xf32> to vector<1x128xf32>
      %cst_22 = arith.constant 5.000000e-01 : f32
      %29 = vector.broadcast %cst_22 : f32 to vector<1x128xf32>
      %30 = arith.mulf %28, %29 : vector<1x128xf32>
      %31 = arith.mulf %26, %18 : vector<8x128xf32>
      %cst_23 = arith.constant dense<0.000000e+00> : vector<128xf32>
      %32 = vector.multi_reduction <add>, %31, %cst_23 [0] : vector<8x128xf32> to vector<128xf32>
      %33 = vector.shape_cast %32 : vector<128xf32> to vector<1x128xf32>
      %cst_24 = arith.constant 5.000000e-01 : f32
      %34 = vector.broadcast %cst_24 : f32 to vector<1x128xf32>
      %35 = arith.mulf %33, %34 : vector<1x128xf32>
      %36 = arith.mulf %30, %30 : vector<1x128xf32>
      %37 = arith.subf %35, %36 : vector<1x128xf32>
      %cst_25 = arith.constant 0.000000e+00 : f32
      %38 = vector.broadcast %cst_25 : f32 to vector<1x128xf32>
      %39 = arith.maximumf %37, %38 : vector<1x128xf32>
      %40 = vector.broadcast %30 : vector<1x128xf32> to vector<8x128xf32>
      %41 = arith.subf %18, %40 : vector<8x128xf32>
      %cst_26 = arith.constant 9.99999974E-6 : f32
      %42 = vector.broadcast %cst_26 : f32 to vector<1x128xf32>
      %43 = arith.addf %39, %42 : vector<1x128xf32>
      %44 = math.rsqrt %43 : vector<1x128xf32>
      %45 = vector.broadcast %44 : vector<1x128xf32> to vector<8x128xf32>
      %46 = arith.mulf %41, %45 : vector<8x128xf32>
      %47 = vector.broadcast %19 : vector<1x128xf32> to vector<8x128xf32>
      %48 = arith.mulf %46, %47 : vector<8x128xf32>
      %49 = vector.broadcast %20 : vector<1x128xf32> to vector<8x128xf32>
      %50 = arith.addf %48, %49 : vector<8x128xf32>
      %cst_27 = arith.constant 2.000000e+01 : f32
      %51 = vector.broadcast %cst_27 : f32 to vector<8x128xf32>
      %52 = arith.minimumf %50, %51 : vector<8x128xf32>
      %53 = math.exp %52 : vector<8x128xf32>
      %cst_28 = arith.constant 1.000000e+00 : f32
      %54 = vector.broadcast %cst_28 : f32 to vector<8x128xf32>
      %55 = arith.addf %54, %53 : vector<8x128xf32>
      %cst_29 = arith.constant 1.000000e+00 : f32
      %56 = vector.broadcast %cst_29 : f32 to vector<8x128xf32>
      %57 = arith.addf %56, %53 : vector<8x128xf32>
      %58 = arith.mulf %55, %57 : vector<8x128xf32>
      %cst_30 = arith.constant 1.000000e+00 : f32
      %59 = vector.broadcast %cst_30 : f32 to vector<8x128xf32>
      %60 = arith.subf %58, %59 : vector<8x128xf32>
      %61 = arith.mulf %50, %60 : vector<8x128xf32>
      %cst_31 = arith.constant 1.000000e+00 : f32
      %62 = vector.broadcast %cst_31 : f32 to vector<8x128xf32>
      %63 = arith.addf %58, %62 : vector<8x128xf32>
      %64 = tpu.reciprocal %63 {approx = true} : vector<8x128xf32> -> vector<8x128xf32>
      %65 = arith.mulf %61, %64 : vector<8x128xf32>
      %c0_32 = arith.constant 0 : index
      %c0_33 = arith.constant 0 : index
      %66 = vector.load %arg6[%c0_32, %c0_33] : memref<128x128xf32, #tpu.memory_space<vmem>>, vector<128x128xf32>
      %cst_34 = arith.constant dense<0.000000e+00> : vector<8x128xf32>
      %67 = tpu.matmul %65, %66, %cst_34 {dimension_numbers = #tpu.dot_dimension_numbers<[1], [0], [0], [1], [0, 0, 1, 1], [], []>} : vector<8x128xf32>, vector<128x128xf32>, vector<8x128xf32> -> vector<8x128xf32>
      %c0_35 = arith.constant 0 : index
      %c0_36 = arith.constant 0 : index
      %68 = vector.load %arg7[%c0_35, %c0_36] : memref<1x128xf32, #tpu.memory_space<vmem>>, vector<1x128xf32>
      %69 = vector.broadcast %68 : vector<1x128xf32> to vector<8x128xf32>
      %70 = arith.addf %67, %69 : vector<8x128xf32>
      %c0_37 = arith.constant 0 : index
      %c0_38 = arith.constant 0 : index
      %71 = vector.load %arg8[%c0_37, %c0_38] : memref<1x128xf32, #tpu.memory_space<vmem>>, vector<1x128xf32>
      %c0_39 = arith.constant 0 : index
      %c0_40 = arith.constant 0 : index
      %72 = vector.load %arg9[%c0_39, %c0_40] : memref<1x128xf32, #tpu.memory_space<vmem>>, vector<1x128xf32>
      %73 = tpu.iota {dimensions = array<i32: 0>} : vector<8x128xi32>
      %c2_i32_41 = arith.constant 2 : i32
      %74 = vector.broadcast %c2_i32_41 : i32 to vector<8x128xi32>
      %75 = arith.cmpi slt, %73, %74 : vector<8x128xi32>
      %76 = arith.extui %75 : vector<8x128xi1> to vector<8x128xi32>
      %77 = arith.sitofp %76 : vector<8x128xi32> to vector<8x128xf32>
      %78 = arith.mulf %70, %77 : vector<8x128xf32>
      %cst_42 = arith.constant dense<0.000000e+00> : vector<128xf32>
      %79 = vector.multi_reduction <add>, %78, %cst_42 [0] : vector<8x128xf32> to vector<128xf32>
      %80 = vector.shape_cast %79 : vector<128xf32> to vector<1x128xf32>
      %cst_43 = arith.constant 5.000000e-01 : f32
      %81 = vector.broadcast %cst_43 : f32 to vector<1x128xf32>
      %82 = arith.mulf %80, %81 : vector<1x128xf32>
      %83 = arith.mulf %78, %70 : vector<8x128xf32>
      %cst_44 = arith.constant dense<0.000000e+00> : vector<128xf32>
      %84 = vector.multi_reduction <add>, %83, %cst_44 [0] : vector<8x128xf32> to vector<128xf32>
      %85 = vector.shape_cast %84 : vector<128xf32> to vector<1x128xf32>
      %cst_45 = arith.constant 5.000000e-01 : f32
      %86 = vector.broadcast %cst_45 : f32 to vector<1x128xf32>
      %87 = arith.mulf %85, %86 : vector<1x128xf32>
      %88 = arith.mulf %82, %82 : vector<1x128xf32>
      %89 = arith.subf %87, %88 : vector<1x128xf32>
      %cst_46 = arith.constant 0.000000e+00 : f32
      %90 = vector.broadcast %cst_46 : f32 to vector<1x128xf32>
      %91 = arith.maximumf %89, %90 : vector<1x128xf32>
      %92 = vector.broadcast %82 : vector<1x128xf32> to vector<8x128xf32>
      %93 = arith.subf %70, %92 : vector<8x128xf32>
      %cst_47 = arith.constant 9.99999974E-6 : f32
      %94 = vector.broadcast %cst_47 : f32 to vector<1x128xf32>
      %95 = arith.addf %91, %94 : vector<1x128xf32>
      %96 = math.rsqrt %95 : vector<1x128xf32>
      %97 = vector.broadcast %96 : vector<1x128xf32> to vector<8x128xf32>
      %98 = arith.mulf %93, %97 : vector<8x128xf32>
      %99 = vector.broadcast %71 : vector<1x128xf32> to vector<8x128xf32>
      %100 = arith.mulf %98, %99 : vector<8x128xf32>
      %101 = vector.broadcast %72 : vector<1x128xf32> to vector<8x128xf32>
      %102 = arith.addf %100, %101 : vector<8x128xf32>
      %cst_48 = arith.constant 2.000000e+01 : f32
      %103 = vector.broadcast %cst_48 : f32 to vector<8x128xf32>
      %104 = arith.minimumf %102, %103 : vector<8x128xf32>
      %105 = math.exp %104 : vector<8x128xf32>
      %cst_49 = arith.constant 1.000000e+00 : f32
      %106 = vector.broadcast %cst_49 : f32 to vector<8x128xf32>
      %107 = arith.addf %106, %105 : vector<8x128xf32>
      %cst_50 = arith.constant 1.000000e+00 : f32
      %108 = vector.broadcast %cst_50 : f32 to vector<8x128xf32>
      %109 = arith.addf %108, %105 : vector<8x128xf32>
      %110 = arith.mulf %107, %109 : vector<8x128xf32>
      %cst_51 = arith.constant 1.000000e+00 : f32
      %111 = vector.broadcast %cst_51 : f32 to vector<8x128xf32>
      %112 = arith.subf %110, %111 : vector<8x128xf32>
      %113 = arith.mulf %102, %112 : vector<8x128xf32>
      %cst_52 = arith.constant 1.000000e+00 : f32
      %114 = vector.broadcast %cst_52 : f32 to vector<8x128xf32>
      %115 = arith.addf %110, %114 : vector<8x128xf32>
      %116 = tpu.reciprocal %115 {approx = true} : vector<8x128xf32> -> vector<8x128xf32>
      %117 = arith.mulf %113, %116 : vector<8x128xf32>
      %c0_53 = arith.constant 0 : index
      %c0_54 = arith.constant 0 : index
      %118 = vector.load %arg10[%c0_53, %c0_54] : memref<128x128xf32, #tpu.memory_space<vmem>>, vector<128x128xf32>
      %cst_55 = arith.constant dense<0.000000e+00> : vector<8x128xf32>
      %119 = tpu.matmul %117, %118, %cst_55 {dimension_numbers = #tpu.dot_dimension_numbers<[1], [0], [0], [1], [0, 0, 1, 1], [], []>} : vector<8x128xf32>, vector<128x128xf32>, vector<8x128xf32> -> vector<8x128xf32>
      %c0_56 = arith.constant 0 : index
      %c0_57 = arith.constant 0 : index
      %120 = vector.load %arg11[%c0_56, %c0_57] : memref<1x128xf32, #tpu.memory_space<vmem>>, vector<1x128xf32>
      %121 = vector.broadcast %120 : vector<1x128xf32> to vector<8x128xf32>
      %122 = arith.addf %119, %121 : vector<8x128xf32>
      %c0_58 = arith.constant 0 : index
      %c0_59 = arith.constant 0 : index
      %123 = vector.load %arg12[%c0_58, %c0_59] : memref<8x128xf32, #tpu.memory_space<vmem>>, vector<8x128xf32>
      tpu.vector_store %arg12[%c0_58, %c0_59], %122 {strides = array<i32>} : memref<8x128xf32, #tpu.memory_space<vmem>>, vector<8x128xf32>,
    } else {
    }
    return
  }
  func.func @transform_0(%arg0: i32) -> (i32, i32, i32) {
    %c0_i32 = arith.constant 0 : i32
    %c0_i32_0 = arith.constant 0 : i32
    %c0_i32_1 = arith.constant 0 : i32
    return %c0_i32, %arg0, %c0_i32_0 : i32, i32, i32
  }
  func.func @transform_1(%arg0: i32) -> (i32, i32) {
    %c0_i32 = arith.constant 0 : i32
    %c0_i32_0 = arith.constant 0 : i32
    return %arg0, %c0_i32 : i32, i32
  }
  func.func @transform_2(%arg0: i32) -> (i32, i32) {
    %c0_i32 = arith.constant 0 : i32
    %c0_i32_0 = arith.constant 0 : i32
    %c0_i32_1 = arith.constant 0 : i32
    return %c0_i32, %c0_i32_0 : i32, i32
  }
  func.func @transform_3(%arg0: i32) -> (i32, i32) {
    %c0_i32 = arith.constant 0 : i32
    %c0_i32_0 = arith.constant 0 : i32
    %c0_i32_1 = arith.constant 0 : i32
    return %c0_i32, %c0_i32_0 : i32, i32
  }
  func.func @transform_4(%arg0: i32) -> (i32, i32) {
    %c0_i32 = arith.constant 0 : i32
    %c0_i32_0 = arith.constant 0 : i32
    %c0_i32_1 = arith.constant 0 : i32
    return %c0_i32, %c0_i32_0 : i32, i32
  }
  func.func @transform_5(%arg0: i32) -> (i32, i32) {
    %c0_i32 = arith.constant 0 : i32
    %c0_i32_0 = arith.constant 0 : i32
    %c0_i32_1 = arith.constant 0 : i32
    return %c0_i32, %c0_i32_0 : i32, i32
  }
  func.func @transform_6(%arg0: i32) -> (i32, i32) {
    %c0_i32 = arith.constant 0 : i32
    %c0_i32_0 = arith.constant 0 : i32
    %c0_i32_1 = arith.constant 0 : i32
    return %c0_i32, %c0_i32_0 : i32, i32
  }
  func.func @transform_7(%arg0: i32) -> (i32, i32) {
    %c0_i32 = arith.constant 0 : i32
    %c0_i32_0 = arith.constant 0 : i32
    %c0_i32_1 = arith.constant 0 : i32
    return %c0_i32, %c0_i32_0 : i32, i32
  }
  func.func @transform_8(%arg0: i32) -> (i32, i32) {
    %c0_i32 = arith.constant 0 : i32
    %c0_i32_0 = arith.constant 0 : i32
    %c0_i32_1 = arith.constant 0 : i32
    return %c0_i32, %c0_i32_0 : i32, i32
  }
  func.func @transform_9(%arg0: i32) -> (i32, i32) {
    %c0_i32 = arith.constant 0 : i32
    %c0_i32_0 = arith.constant 0 : i32
    %c0_i32_1 = arith.constant 0 : i32
    return %c0_i32, %c0_i32_0 : i32, i32
  }
  func.func @transform_10(%arg0: i32) -> (i32, i32) {
    %c0_i32 = arith.constant 0 : i32
    %c0_i32_0 = arith.constant 0 : i32
    %c0_i32_1 = arith.constant 0 : i32
    return %c0_i32, %c0_i32_0 : i32, i32
  }
  func.func @transform_11(%arg0: i32) -> (i32, i32) {
    %c0_i32 = arith.constant 0 : i32
    %c0_i32_0 = arith.constant 0 : i32
    %c0_i32_1 = arith.constant 0 : i32
    return %c0_i32, %c0_i32_0 : i32, i32
  }
}

</mosaic_0001>

<llo_original>
// kernel: tpu_custom_call.1
$region0: #{tpu_custom_call.1}
  #allocation0 [shape = 'u32[]', space=smem, size = 0x4, offset = 0x4, fixed_abs, tag = 'smem constant byte address 0x4 - core index']
  #allocation1 [shape = 'u32[144,128]{1,0:T(1,128)}', space=vmem, size = 0x12000, scoped, tag = 'internal scratch']
  #allocation2 [shape = 'f32[8,128]{1,0:T(8,128)}', space=vmem, size = 0x1000, scoped, tag = 'scratch operand']
  %s0 = inlined_call_operand.hbm [shape: f32[8,32,256], index: 0, kind: input, shape index: {}]
  %s1 = inlined_call_operand.hbm [shape: f32[32,128], index: 1, kind: input, shape index: {}]
  %s2 = inlined_call_operand.vmem [shape: f32[1,128], index: 2, kind: input, shape index: {}]
  %s3 = inlined_call_operand.vmem [shape: f32[1,128], index: 3, kind: input, shape index: {}]
  %s4 = inlined_call_operand.vmem [shape: f32[1,128], index: 4, kind: input, shape index: {}]
  %s5 = inlined_call_operand.hbm [shape: f32[128,128], index: 5, kind: input, shape index: {}]
  %s6 = inlined_call_operand.vmem [shape: f32[1,128], index: 6, kind: input, shape index: {}]
  %s7 = inlined_call_operand.vmem [shape: f32[1,128], index: 7, kind: input, shape index: {}]
  %s8 = inlined_call_operand.vmem [shape: f32[1,128], index: 8, kind: input, shape index: {}]
  %s9 = inlined_call_operand.hbm [shape: f32[128,128], index: 9, kind: input, shape index: {}]
  %s10 = inlined_call_operand.vmem [shape: f32[1,128], index: 10, kind: input, shape index: {}]
  %s11 = inlined_call_operand.hbm [shape: f32[8,128], index: 11, kind: output, shape index: {}]
  %s12 = sld [smem:[#allocation0]]
  $region78: #{tpu_custom_call.1} parent=0
    _
  %s14 = ssub.s32 1, %s12
  %s15 = scalar_select 0, %s14, %s12
  $region1: #{tpu_custom_call.1} parent=0
    #allocation3 [shape = 'u8[262144]{0}', space=vmem, size = 0x40000, scoped, tag = 'input window, operand 0, single buffered']
    #allocation4 [shape = 's32[1]{0}', space=sflag, size = 0x4, scoped, tag = 'scoped memory for tpu_custom_call.1']
    #allocation5 [shape = 's32[1]{0}', space=sflag, size = 0x4, scoped, tag = 'scoped memory for tpu_custom_call.1']
    #allocation6 [shape = 'u8[16384]{0}', space=vmem, size = 0x4000, scoped, tag = 'input window, operand 1, single buffered']
    #allocation7 [shape = 's32[1]{0}', space=sflag, size = 0x4, scoped, tag = 'scoped memory for tpu_custom_call.1']
    #allocation8 [shape = 'u8[65536]{0}', space=vmem, size = 0x10000, scoped, tag = 'input window, operand 5, single buffered']
    #allocation9 [shape = 'u8[65536]{0}', space=vmem, size = 0x10000, scoped, tag = 'input window, operand 9, single buffered']
    #allocation10 [shape = 's32[1]{0}', space=sflag, size = 0x4, scoped, tag = 'scoped memory for tpu_custom_call.1']
    #allocation11 [shape = 'u8[4096]{0}', space=vmem, size = 0x1000, scoped, tag = 'output window, operand 0, single buffered']
    %16 = vsyncpa [#allocation4], 0
    %17 = vsyncpa [#allocation7], 0
    %18 = vsyncpa [#allocation10], 0
    %19 = vsyncpa [#allocation5], 0
    // Predicated region
    $region2: #{tpu_custom_call.1} parent=1 // pred_check
      _
    $region3: #{tpu_custom_call.1} parent=1 // pred_check_branch
      %21 = sbr.rel (0) target = $region5
    $region4: #{tpu_custom_call.1} parent=1 // pred_region
      %s23 = ssub.s32 8192, 8192
      %24 = vsyncadd [#allocation4], %s23
      %s25 = sshll.u32 [#allocation3], 4
      %s26 = int_to_ptr.vmem [resolvable:$true] %s25
      %31 = dma.hbm_to_vmem [thread:$0]  %s0, 8192, %s26, [#allocation4], 256, 256, 16
    $region5: #{tpu_custom_call.1} parent=1 // pred_fallthru
      _
    // Predicated region
    $region6: #{tpu_custom_call.1} parent=1 // pred_check
      _
    $region7: #{tpu_custom_call.1} parent=1 // pred_check_branch
      %33 = sbr.rel (0) target = $region9
    $region8: #{tpu_custom_call.1} parent=1 // pred_region
      %s35 = ssub.s32 512, 512
      %36 = vsyncadd [#allocation7], %s35
      %s37 = sshll.u32 [#allocation6], 4
      %s38 = int_to_ptr.vmem [resolvable:$true] %s37
      %43 = dma.hbm_to_vmem [thread:$0]  %s1, 512, %s38, [#allocation7], 128, 128, 8
    $region9: #{tpu_custom_call.1} parent=1 // pred_fallthru
      _
    // Predicated region
    $region10: #{tpu_custom_call.1} parent=1 // pred_check
      _
    $region11: #{tpu_custom_call.1} parent=1 // pred_check_branch
      %45 = sbr.rel (0) target = $region13
    $region12: #{tpu_custom_call.1} parent=1 // pred_region
      _
    $region13: #{tpu_custom_call.1} parent=1 // pred_fallthru
      _
    // Predicated region
    $region14: #{tpu_custom_call.1} parent=1 // pred_check
      _
    $region15: #{tpu_custom_call.1} parent=1 // pred_check_branch
      %47 = sbr.rel (0) target = $region17
    $region16: #{tpu_custom_call.1} parent=1 // pred_region
      _
    $region17: #{tpu_custom_call.1} parent=1 // pred_fallthru
      _
    // Predicated region
    $region18: #{tpu_custom_call.1} parent=1 // pred_check
      _
    $region19: #{tpu_custom_call.1} parent=1 // pred_check_branch
      %49 = sbr.rel (0) target = $region21
    $region20: #{tpu_custom_call.1} parent=1 // pred_region
      _
    $region21: #{tpu_custom_call.1} parent=1 // pred_fallthru
      _
    // Predicated region
    $region22: #{tpu_custom_call.1} parent=1 // pred_check
      _
    $region23: #{tpu_custom_call.1} parent=1 // pred_check_branch
      %51 = sbr.rel (0) target = $region25
    $region24: #{tpu_custom_call.1} parent=1 // pred_region
      %s53 = ssub.s32 2048, 2048
      %54 = vsyncadd [#allocation7], %s53
      %s55 = sshll.u32 [#allocation8], 4
      %s56 = int_to_ptr.vmem [resolvable:$true] %s55
      %61 = dma.hbm_to_vmem [thread:$0]  %s5, 2048, %s56, [#allocation7], 128, 128, 8
    $region25: #{tpu_custom_call.1} parent=1 // pred_fallthru
      _
    // Predicated region
    $region26: #{tpu_custom_call.1} parent=1 // pred_check
      _
    $region27: #{tpu_custom_call.1} parent=1 // pred_check_branch
      %63 = sbr.rel (0) target = $region29
    $region28: #{tpu_custom_call.1} parent=1 // pred_region
      _
    $region29: #{tpu_custom_call.1} parent=1 // pred_fallthru
      _
    // Predicated region
    $region30: #{tpu_custom_call.1} parent=1 // pred_check
      _
    $region31: #{tpu_custom_call.1} parent=1 // pred_check_branch
      %65 = sbr.rel (0) target = $region33
    $region32: #{tpu_custom_call.1} parent=1 // pred_region
      _
    $region33: #{tpu_custom_call.1} parent=1 // pred_fallthru
      _
    // Predicated region
    $region34: #{tpu_custom_call.1} parent=1 // pred_check
      _
    $region35: #{tpu_custom_call.1} parent=1 // pred_check_branch
      %67 = sbr.rel (0) target = $region37
    $region36: #{tpu_custom_call.1} parent=1 // pred_region
      _
    $region37: #{tpu_custom_call.1} parent=1 // pred_fallthru
      _
    // Predicated region
    $region38: #{tpu_custom_call.1} parent=1 // pred_check
      _
    $region39: #{tpu_custom_call.1} parent=1 // pred_check_branch
      %69 = sbr.rel (0) target = $region41
    $region40: #{tpu_custom_call.1} parent=1 // pred_region
      %s71 = ssub.s32 2048, 2048
      %72 = vsyncadd [#allocation10], %s71
      %s73 = sshll.u32 [#allocation9], 4
      %s74 = int_to_ptr.vmem [resolvable:$true] %s73
      %79 = dma.hbm_to_vmem [thread:$0]  %s9, 2048, %s74, [#allocation10], 128, 128, 8
    $region41: #{tpu_custom_call.1} parent=1 // pred_fallthru
      _
    // Predicated region
    $region42: #{tpu_custom_call.1} parent=1 // pred_check
      _
    $region43: #{tpu_custom_call.1} parent=1 // pred_check_branch
      %81 = sbr.rel (0) target = $region45
    $region44: #{tpu_custom_call.1} parent=1 // pred_region
      _
    $region45: #{tpu_custom_call.1} parent=1 // pred_fallthru
      _
    // Predicated region
    $region46: #{tpu_custom_call.1} parent=1 // pred_check
      _
    $region47: #{tpu_custom_call.1} parent=1 // pred_check_branch
      %83 = sbr.rel (0) target = $region49
    $region48: #{tpu_custom_call.1} parent=1 // pred_region
      %84 = dma.done [#allocation4], 8192
    $region49: #{tpu_custom_call.1} parent=1 // pred_fallthru
      _
    // Predicated region
    $region50: #{tpu_custom_call.1} parent=1 // pred_check
      _
    $region51: #{tpu_custom_call.1} parent=1 // pred_check_branch
      %86 = sbr.rel (0) target = $region53
    $region52: #{tpu_custom_call.1} parent=1 // pred_region
      %87 = dma.done [#allocation7], 512
    $region53: #{tpu_custom_call.1} parent=1 // pred_fallthru
      _
    // Predicated region
    $region54: #{tpu_custom_call.1} parent=1 // pred_check
      _
    $region55: #{tpu_custom_call.1} parent=1 // pred_check_branch
      %89 = sbr.rel (0) target = $region57
    $region56: #{tpu_custom_call.1} parent=1 // pred_region
      %90 = dma.done [#allocation7], 2048
    $region57: #{tpu_custom_call.1} parent=1 // pred_fallthru
      _
    // Predicated region
    $region58: #{tpu_custom_call.1} parent=1 // pred_check
      _
    $region59: #{tpu_custom_call.1} parent=1 // pred_check_branch
      %92 = sbr.rel (0) target = $region61
    $region60: #{tpu_custom_call.1} parent=1 // pred_region
      %93 = dma.done [#allocation10], 2048
    $region61: #{tpu_custom_call.1} parent=1 // pred_fallthru
      _
    %p94 = scmp.eq.s32.totalorder 0, 0
    // Predicated region
    $region62: #{tpu_custom_call.1} parent=1 // pred_check
      %p95 = pneg %p94
    $region63: #{tpu_custom_call.1} parent=1 // pred_check_branch
      %97 = sbr.rel (%p95) target = $region65
    $region64: #{tpu_custom_call.1} parent=1 // pred_region
      %98 = vst [vmem:[#allocation2] sm:$0xff] 0.0
    $region65: #{tpu_custom_call.1} parent=1 // pred_fallthru
      _
    %v99 = vld [vmem:[#allocation3] sm:$0xff]
    %v100 = vld [vmem:[#allocation3 + $0x8] sm:$0xff]
    %v101 = vld [vmem:[#allocation3 + $0x10] sm:$0xff]
    %v102 = vld [vmem:[#allocation3 + $0x18] sm:$0xff]
    %v103 = vld [vmem:[#allocation3 + $0x20] sm:$0xff]
    %v104 = vld [vmem:[#allocation3 + $0x28] sm:$0xff]
    %v105 = vld [vmem:[#allocation3 + $0x30] sm:$0xff]
    %v106 = vld [vmem:[#allocation3 + $0x38] sm:$0xff]
    %v107 = vld [vmem:[#allocation3 + $0x40] sm:$0xff]
    %v108 = vld [vmem:[#allocation3 + $0x48] sm:$0xff]
    %v109 = vld [vmem:[#allocation3 + $0x50] sm:$0xff]
    %v110 = vld [vmem:[#allocation3 + $0x58] sm:$0xff]
    %v111 = vld [vmem:[#allocation3 + $0x60] sm:$0xff]
    %v112 = vld [vmem:[#allocation3 + $0x68] sm:$0xff]
    %v113 = vld [vmem:[#allocation3 + $0x70] sm:$0xff]
    %v114 = vld [vmem:[#allocation3 + $0x78] sm:$0xff]
    %v115 = vld [vmem:[#allocation3 + $0x80] sm:$0xff]
    %v116 = vld [vmem:[#allocation3 + $0x88] sm:$0xff]
    %v117 = vld [vmem:[#allocation3 + $0x90] sm:$0xff]
    %v118 = vld [vmem:[#allocation3 + $0x98] sm:$0xff]
    %v119 = vld [vmem:[#allocation3 + $0xa0] sm:$0xff]
    %v120 = vld [vmem:[#allocation3 + $0xa8] sm:$0xff]
    %v121 = vld [vmem:[#allocation3 + $0xb0] sm:$0xff]
    %v122 = vld [vmem:[#allocation3 + $0xb8] sm:$0xff]
    %v123 = vld [vmem:[#allocation3 + $0xc0] sm:$0xff]
    %v124 = vld [vmem:[#allocation3 + $0xc8] sm:$0xff]
    %v125 = vld [vmem:[#allocation3 + $0xd0] sm:$0xff]
    %v126 = vld [vmem:[#allocation3 + $0xd8] sm:$0xff]
    %v127 = vld [vmem:[#allocation3 + $0xe0] sm:$0xff]
    %v128 = vld [vmem:[#allocation3 + $0xe8] sm:$0xff]
    %v129 = vld [vmem:[#allocation3 + $0xf0] sm:$0xff]
    %v130 = vld [vmem:[#allocation3 + $0xf8] sm:$0xff]
    %v131 = vld [vmem:[#allocation3 + $0x100] sm:$0xff]
    %v132 = vld [vmem:[#allocation3 + $0x108] sm:$0xff]
    %v133 = vld [vmem:[#allocation3 + $0x110] sm:$0xff]
    %v134 = vld [vmem:[#allocation3 + $0x118] sm:$0xff]
    %v135 = vld [vmem:[#allocation3 + $0x120] sm:$0xff]
    %v136 = vld [vmem:[#allocation3 + $0x128] sm:$0xff]
    %v137 = vld [vmem:[#allocation3 + $0x130] sm:$0xff]
    %v138 = vld [vmem:[#allocation3 + $0x138] sm:$0xff]
    %v139 = vld [vmem:[#allocation3 + $0x140] sm:$0xff]
    %v140 = vld [vmem:[#allocation3 + $0x148] sm:$0xff]
    %v141 = vld [vmem:[#allocation3 + $0x150] sm:$0xff]
    %v142 = vld [vmem:[#allocation3 + $0x158] sm:$0xff]
    %v143 = vld [vmem:[#allocation3 + $0x160] sm:$0xff]
    %v144 = vld [vmem:[#allocation3 + $0x168] sm:$0xff]
    %v145 = vld [vmem:[#allocation3 + $0x170] sm:$0xff]
    %v146 = vld [vmem:[#allocation3 + $0x178] sm:$0xff]
    %v147 = vld [vmem:[#allocation3 + $0x180] sm:$0xff]
    %v148 = vld [vmem:[#allocation3 + $0x188] sm:$0xff]
    %v149 = vld [vmem:[#allocation3 + $0x190] sm:$0xff]
    %v150 = vld [vmem:[#allocation3 + $0x198] sm:$0xff]
    %v151 = vld [vmem:[#allocation3 + $0x1a0] sm:$0xff]
    %v152 = vld [vmem:[#allocation3 + $0x1a8] sm:$0xff]
    %v153 = vld [vmem:[#allocation3 + $0x1b0] sm:$0xff]
    %v154 = vld [vmem:[#allocation3 + $0x1b8] sm:$0xff]
    %v155 = vld [vmem:[#allocation3 + $0x1c0] sm:$0xff]
    %v156 = vld [vmem:[#allocation3 + $0x1c8] sm:$0xff]
    %v157 = vld [vmem:[#allocation3 + $0x1d0] sm:$0xff]
    %v158 = vld [vmem:[#allocation3 + $0x1d8] sm:$0xff]
    %v159 = vld [vmem:[#allocation3 + $0x1e0] sm:$0xff]
    %v160 = vld [vmem:[#allocation3 + $0x1e8] sm:$0xff]
    %v161 = vld [vmem:[#allocation3 + $0x1f0] sm:$0xff]
    %v162 = vld [vmem:[#allocation3 + $0x1f8] sm:$0xff]
    %v163 = vadd.f32 %v99, %v100
    %164 = vadd.xlane.f32.xlu0 %v163
    %v165 = vpop.xlane.xlu0 %164
    %v166 = vadd.f32 %v101, %v102
    %167 = vadd.xlane.f32.xlu0 %v166
    %v168 = vpop.xlane.xlu0 %167
    %v169 = vadd.f32 %v103, %v104
    %170 = vadd.xlane.f32.xlu0 %v169
    %v171 = vpop.xlane.xlu0 %170
    %v172 = vadd.f32 %v105, %v106
    %173 = vadd.xlane.f32.xlu0 %v172
    %v174 = vpop.xlane.xlu0 %173
    %v175 = vadd.f32 %v107, %v108
    %176 = vadd.xlane.f32.xlu0 %v175
    %v177 = vpop.xlane.xlu0 %176
    %v178 = vadd.f32 %v109, %v110
    %179 = vadd.xlane.f32.xlu0 %v178
    %v180 = vpop.xlane.xlu0 %179
    %v181 = vadd.f32 %v111, %v112
    %182 = vadd.xlane.f32.xlu0 %v181
    %v183 = vpop.xlane.xlu0 %182
    %v184 = vadd.f32 %v113, %v114
    %185 = vadd.xlane.f32.xlu0 %v184
    %v186 = vpop.xlane.xlu0 %185
    %v187 = vadd.f32 %v115, %v116
    %188 = vadd.xlane.f32.xlu0 %v187
    %v189 = vpop.xlane.xlu0 %188
    %v190 = vadd.f32 %v117, %v118
    %191 = vadd.xlane.f32.xlu0 %v190
    %v192 = vpop.xlane.xlu0 %191
    %v193 = vadd.f32 %v119, %v120
    %194 = vadd.xlane.f32.xlu0 %v193
    %v195 = vpop.xlane.xlu0 %194
    %v196 = vadd.f32 %v121, %v122
    %197 = vadd.xlane.f32.xlu0 %v196
    %v198 = vpop.xlane.xlu0 %197
    %v199 = vadd.f32 %v123, %v124
    %200 = vadd.xlane.f32.xlu0 %v199
    %v201 = vpop.xlane.xlu0 %200
    %v202 = vadd.f32 %v125, %v126
    %203 = vadd.xlane.f32.xlu0 %v202
    %v204 = vpop.xlane.xlu0 %203
    %v205 = vadd.f32 %v127, %v128
    %206 = vadd.xlane.f32.xlu0 %v205
    %v207 = vpop.xlane.xlu0 %206
    %v208 = vadd.f32 %v129, %v130
    %209 = vadd.xlane.f32.xlu0 %v208
    %v210 = vpop.xlane.xlu0 %209
    %v211 = vadd.f32 %v131, %v132
    %212 = vadd.xlane.f32.xlu0 %v211
    %v213 = vpop.xlane.xlu0 %212
    %v214 = vadd.f32 %v133, %v134
    %215 = vadd.xlane.f32.xlu0 %v214
    %v216 = vpop.xlane.xlu0 %215
    %v217 = vadd.f32 %v135, %v136
    %218 = vadd.xlane.f32.xlu0 %v217
    %v219 = vpop.xlane.xlu0 %218
    %v220 = vadd.f32 %v137, %v138
    %221 = vadd.xlane.f32.xlu0 %v220
    %v222 = vpop.xlane.xlu0 %221
    %v223 = vadd.f32 %v139, %v140
    %224 = vadd.xlane.f32.xlu0 %v223
    %v225 = vpop.xlane.xlu0 %224
    %v226 = vadd.f32 %v141, %v142
    %227 = vadd.xlane.f32.xlu0 %v226
    %v228 = vpop.xlane.xlu0 %227
    %v229 = vadd.f32 %v143, %v144
    %230 = vadd.xlane.f32.xlu0 %v229
    %v231 = vpop.xlane.xlu0 %230
    %v232 = vadd.f32 %v145, %v146
    %233 = vadd.xlane.f32.xlu0 %v232
    %v234 = vpop.xlane.xlu0 %233
    %v235 = vadd.f32 %v147, %v148
    %236 = vadd.xlane.f32.xlu0 %v235
    %v237 = vpop.xlane.xlu0 %236
    %v238 = vadd.f32 %v149, %v150
    %239 = vadd.xlane.f32.xlu0 %v238
    %v240 = vpop.xlane.xlu0 %239
    %v241 = vadd.f32 %v151, %v152
    %242 = vadd.xlane.f32.xlu0 %v241
    %v243 = vpop.xlane.xlu0 %242
    %v244 = vadd.f32 %v153, %v154
    %245 = vadd.xlane.f32.xlu0 %v244
    %v246 = vpop.xlane.xlu0 %245
    %v247 = vadd.f32 %v155, %v156
    %248 = vadd.xlane.f32.xlu0 %v247
    %v249 = vpop.xlane.xlu0 %248
    %v250 = vadd.f32 %v157, %v158
    %251 = vadd.xlane.f32.xlu0 %v250
    %v252 = vpop.xlane.xlu0 %251
    %v253 = vadd.f32 %v159, %v160
    %254 = vadd.xlane.f32.xlu0 %v253
    %v255 = vpop.xlane.xlu0 %254
    %v256 = vadd.f32 %v161, %v162
    %257 = vadd.xlane.f32.xlu0 %v256
    %v258 = vpop.xlane.xlu0 %257
    %v259 = vmul.f32 %v165, 0.00390625
    %v260 = vmul.f32 %v168, 0.00390625
    %v261 = vmul.f32 %v171, 0.00390625
    %v262 = vmul.f32 %v174, 0.00390625
    %v263 = vmul.f32 %v177, 0.00390625
    %v264 = vmul.f32 %v180, 0.00390625
    %v265 = vmul.f32 %v183, 0.00390625
    %v266 = vmul.f32 %v186, 0.00390625
    %v267 = vmul.f32 %v189, 0.00390625
    %v268 = vmul.f32 %v192, 0.00390625
    %v269 = vmul.f32 %v195, 0.00390625
    %v270 = vmul.f32 %v198, 0.00390625
    %v271 = vmul.f32 %v201, 0.00390625
    %v272 = vmul.f32 %v204, 0.00390625
    %v273 = vmul.f32 %v207, 0.00390625
    %v274 = vmul.f32 %v210, 0.00390625
    %v275 = vmul.f32 %v213, 0.00390625
    %v276 = vmul.f32 %v216, 0.00390625
    %v277 = vmul.f32 %v219, 0.00390625
    %v278 = vmul.f32 %v222, 0.00390625
    %v279 = vmul.f32 %v225, 0.00390625
    %v280 = vmul.f32 %v228, 0.00390625
    %v281 = vmul.f32 %v231, 0.00390625
    %v282 = vmul.f32 %v234, 0.00390625
    %v283 = vmul.f32 %v237, 0.00390625
    %v284 = vmul.f32 %v240, 0.00390625
    %v285 = vmul.f32 %v243, 0.00390625
    %v286 = vmul.f32 %v246, 0.00390625
    %v287 = vmul.f32 %v249, 0.00390625
    %v288 = vmul.f32 %v252, 0.00390625
    %v289 = vmul.f32 %v255, 0.00390625
    %v290 = vmul.f32 %v258, 0.00390625
    %v291 = vld [vmem:[#allocation2] sm:$0xff]
    %v292 = vld [vmem:[#allocation6] sm:$0xff]
    %v293 = vld [vmem:[#allocation6 + $0x8] sm:$0xff]
    %v294 = vld [vmem:[#allocation6 + $0x10] sm:$0xff]
    %v295 = vld [vmem:[#allocation6 + $0x18] sm:$0xff]
    %v328 = vlaneseq
    %v329 = vand.u32 %v328, 127
    %v330 = vlaneseq
    %v331 = vshrl.u32 %v330, 7
    %v332 = vsub.s32 %v329, %v331
    %v333 = vrot.slane %v259, %v332
    %v334 = vadd.s32 %v329, 4294967288
    %v335 = vlaneseq
    %v336 = vshrl.u32 %v335, 7
    %v337 = vsub.s32 %v334, %v336
    %v338 = vrot.slane %v260, %v337
    %vm339 = vcmask 130112
    %v340 = vsel %vm339, %v338, %v333
    %v341 = vadd.s32 %v329, 4294967280
    %v342 = vlaneseq
    %v343 = vshrl.u32 %v342, 7
    %v344 = vsub.s32 %v341, %v343
    %v345 = vrot.slane %v261, %v344
    %vm346 = vcmask 195712
    %v347 = vsel %vm346, %v345, %v340
    %v348 = vadd.s32 %v329, 4294967272
    %v349 = vlaneseq
    %v350 = vshrl.u32 %v349, 7
    %v351 = vsub.s32 %v348, %v350
    %v352 = vrot.slane %v262, %v351
    %vm353 = vcmask 261312
    %v354 = vsel %vm353, %v352, %v347
    %v355 = vlaneseq
    %v356 = vshrl.u32 %v355, 7
    %v357 = vsub.s32 %v329, %v356
    %v358 = vrot.slane %v263, %v357
    %v359 = vlaneseq
    %v360 = vshrl.u32 %v359, 7
    %v361 = vsub.s32 %v334, %v360
    %v362 = vrot.slane %v264, %v361
    %v363 = vsel %vm339, %v362, %v358
    %v364 = vlaneseq
    %v365 = vshrl.u32 %v364, 7
    %v366 = vsub.s32 %v341, %v365
    %v367 = vrot.slane %v265, %v366
    %v368 = vsel %vm346, %v367, %v363
    %v369 = vlaneseq
    %v370 = vshrl.u32 %v369, 7
    %v371 = vsub.s32 %v348, %v370
    %v372 = vrot.slane %v266, %v371
    %v373 = vsel %vm353, %v372, %v368
    %v374 = vlaneseq
    %v375 = vshrl.u32 %v374, 7
    %v376 = vsub.s32 %v329, %v375
    %v377 = vrot.slane %v267, %v376
    %v378 = vlaneseq
    %v379 = vshrl.u32 %v378, 7
    %v380 = vsub.s32 %v334, %v379
    %v381 = vrot.slane %v268, %v380
    %v382 = vsel %vm339, %v381, %v377
    %v383 = vlaneseq
    %v384 = vshrl.u32 %v383, 7
    %v385 = vsub.s32 %v341, %v384
    %v386 = vrot.slane %v269, %v385
    %v387 = vsel %vm346, %v386, %v382
    %v388 = vlaneseq
    %v389 = vshrl.u32 %v388, 7
    %v390 = vsub.s32 %v348, %v389
    %v391 = vrot.slane %v270, %v390
    %v392 = vsel %vm353, %v391, %v387
    %v393 = vlaneseq
    %v394 = vshrl.u32 %v393, 7
    %v395 = vsub.s32 %v329, %v394
    %v396 = vrot.slane %v271, %v395
    %v397 = vlaneseq
    %v398 = vshrl.u32 %v397, 7
    %v399 = vsub.s32 %v334, %v398
    %v400 = vrot.slane %v272, %v399
    %v401 = vsel %vm339, %v400, %v396
    %v402 = vlaneseq
    %v403 = vshrl.u32 %v402, 7
    %v404 = vsub.s32 %v341, %v403
    %v405 = vrot.slane %v273, %v404
    %v406 = vsel %vm346, %v405, %v401
    %v407 = vlaneseq
    %v408 = vshrl.u32 %v407, 7
    %v409 = vsub.s32 %v348, %v408
    %v410 = vrot.slane %v274, %v409
    %v411 = vsel %vm353, %v410, %v406
    %v412 = vlaneseq
    %v413 = vshrl.u32 %v412, 7
    %v414 = vsub.s32 %v329, %v413
    %v415 = vrot.slane %v275, %v414
    %v416 = vlaneseq
    %v417 = vshrl.u32 %v416, 7
    %v418 = vsub.s32 %v334, %v417
    %v419 = vrot.slane %v276, %v418
    %v420 = vsel %vm339, %v419, %v415
    %v421 = vlaneseq
    %v422 = vshrl.u32 %v421, 7
    %v423 = vsub.s32 %v341, %v422
    %v424 = vrot.slane %v277, %v423
    %v425 = vsel %vm346, %v424, %v420
    %v426 = vlaneseq
    %v427 = vshrl.u32 %v426, 7
    %v428 = vsub.s32 %v348, %v427
    %v429 = vrot.slane %v278, %v428
    %v430 = vsel %vm353, %v429, %v425
    %v431 = vlaneseq
    %v432 = vshrl.u32 %v431, 7
    %v433 = vsub.s32 %v329, %v432
    %v434 = vrot.slane %v279, %v433
    %v435 = vlaneseq
    %v436 = vshrl.u32 %v435, 7
    %v437 = vsub.s32 %v334, %v436
    %v438 = vrot.slane %v280, %v437
    %v439 = vsel %vm339, %v438, %v434
    %v440 = vlaneseq
    %v441 = vshrl.u32 %v440, 7
    %v442 = vsub.s32 %v341, %v441
    %v443 = vrot.slane %v281, %v442
    %v444 = vsel %vm346, %v443, %v439
    %v445 = vlaneseq
    %v446 = vshrl.u32 %v445, 7
    %v447 = vsub.s32 %v348, %v446
    %v448 = vrot.slane %v282, %v447
    %v449 = vsel %vm353, %v448, %v444
    %v450 = vlaneseq
    %v451 = vshrl.u32 %v450, 7
    %v452 = vsub.s32 %v329, %v451
    %v453 = vrot.slane %v283, %v452
    %v454 = vlaneseq
    %v455 = vshrl.u32 %v454, 7
    %v456 = vsub.s32 %v334, %v455
    %v457 = vrot.slane %v284, %v456
    %v458 = vsel %vm339, %v457, %v453
    %v459 = vlaneseq
    %v460 = vshrl.u32 %v459, 7
    %v461 = vsub.s32 %v341, %v460
    %v462 = vrot.slane %v285, %v461
    %v463 = vsel %vm346, %v462, %v458
    %v464 = vlaneseq
    %v465 = vshrl.u32 %v464, 7
    %v466 = vsub.s32 %v348, %v465
    %v467 = vrot.slane %v286, %v466
    %v468 = vsel %vm353, %v467, %v463
    %v469 = vlaneseq
    %v470 = vshrl.u32 %v469, 7
    %v471 = vsub.s32 %v329, %v470
    %v472 = vrot.slane %v287, %v471
    %v473 = vlaneseq
    %v474 = vshrl.u32 %v473, 7
    %v475 = vsub.s32 %v334, %v474
    %v476 = vrot.slane %v288, %v475
    %v477 = vsel %vm339, %v476, %v472
    %v478 = vlaneseq
    %v479 = vshrl.u32 %v478, 7
    %v480 = vsub.s32 %v341, %v479
    %v481 = vrot.slane %v289, %v480
    %v482 = vsel %vm346, %v481, %v477
    %v483 = vlaneseq
    %v484 = vshrl.u32 %v483, 7
    %v485 = vsub.s32 %v348, %v484
    %v486 = vrot.slane %v290, %v485
    %v487 = vsel %vm353, %v486, %v482
    %vm488 = vcmask 1041409
    %v489 = vsel %vm488, %v373, %v354
    %vm490 = vcmask 1042434
    %v491 = vsel %vm490, %v392, %v489
    %vm492 = vcmask 1043459
    %v493 = vsel %vm492, %v411, %v491
    %vm494 = vcmask 1044484
    %v495 = vsel %vm494, %v430, %v493
    %vm496 = vcmask 1045509
    %v497 = vsel %vm496, %v449, %v495
    %vm498 = vcmask 1046534
    %v499 = vsel %vm498, %v468, %v497
    %vm500 = vcmask 1047559
    %v501 = vsel %vm500, %v487, %v499
    %vm502 = vcmask 261120
    %v503 = vsel %vm502, %v501, 0
    %505 = vmatprep.subr.mxu0 0.0
    %506 = vmatpush1.msra.mxu0 %v292
    %507 = vmatprep.subr.mxu0 0.0
    %508 = vmatpush1.msra.mxu0 %v293
    %509 = vmatprep.subr.mxu0 0.0
    %510 = vmatpush1.msra.mxu0 %v294
    %511 = vmatprep.subr.mxu0 0.0
    %512 = vmatpush1.msra.mxu0 %v295
    %513 = vmatprep.subr.mxu0 0.0
    %514 = vmatpush1.msra.mxu0 0.0
    %515 = vmatprep.subr.mxu0 0.0
    %516 = vmatpush1.msra.mxu0 0.0
    %517 = vmatprep.subr.mxu0 0.0
    %518 = vmatpush1.msra.mxu0 0.0
    %519 = vmatprep.subr.mxu0 0.0
    %520 = vmatpush1.msra.mxu0 0.0
    %521 = vmatprep.subr.mxu0 0.0
    %522 = vmatpush1.msra.mxu0 0.0
    %523 = vmatprep.subr.mxu0 0.0
    %524 = vmatpush1.msra.mxu0 0.0
    %525 = vmatprep.subr.mxu0 0.0
    %526 = vmatpush1.msra.mxu0 0.0
    %527 = vmatprep.subr.mxu0 0.0
    %528 = vmatpush1.msra.mxu0 0.0
    %529 = vmatprep.subr.mxu0 0.0
    %530 = vmatpush1.msra.mxu0 0.0
    %531 = vmatprep.subr.mxu0 0.0
    %532 = vmatpush1.msra.mxu0 0.0
    %533 = vmatprep.subr.mxu0 0.0
    %534 = vmatpush1.msra.mxu0 0.0
    %535 = vmatprep.subr.mxu0 0.0
    %536 = vmatpush1.msra.mxu0 0.0
    %537 = vmatprep.subr.mxu0 0.0
    %538 = vmatpush1.msra.mxu0 0.0
    %539 = vmatprep.subr.mxu0 0.0
    %540 = vmatpush1.msra.mxu0 0.0
    %541 = vmatprep.subr.mxu0 0.0
    %542 = vmatpush1.msra.mxu0 0.0
    %543 = vmatprep.subr.mxu0 0.0
    %544 = vmatpush1.msra.mxu0 0.0
    %545 = vmatprep.subr.mxu0 0.0
    %546 = vmatpush1.msra.mxu0 0.0
    %547 = vmatprep.subr.mxu0 0.0
    %548 = vmatpush1.msra.mxu0 0.0
    %549 = vmatprep.subr.mxu0 0.0
    %550 = vmatpush1.msra.mxu0 0.0
    %551 = vmatprep.subr.mxu0 0.0
    %552 = vmatpush1.msra.mxu0 0.0
    %553 = vmatprep.subr.mxu0 0.0
    %554 = vmatpush1.msra.mxu0 0.0
    %555 = vmatprep.subr.mxu0 0.0
    %556 = vmatpush1.msra.mxu0 0.0
    %557 = vmatprep.subr.mxu0 0.0
    %558 = vmatpush1.msra.mxu0 0.0
    %559 = vmatprep.subr.mxu0 0.0
    %560 = vmatpush1.msra.mxu0 0.0
    %561 = vmatprep.subr.mxu0 0.0
    %562 = vmatpush1.msra.mxu0 0.0
    %563 = vmatprep.subr.mxu0 0.0
    %564 = vmatpush1.msra.mxu0 0.0
    %565 = vmatprep.subr.mxu0 0.0
    %566 = vmatpush1.msra.mxu0 0.0
    %567 = vmatprep.subr.mxu0 0.0
    %568 = vmatpush1.msra.mxu0 0.0
    %569 = vmatprep.mubr.f32.mxu0 0.0
    %570 = vmatmul.mubr.f32.gmra.mrb[0].mxu0 %v503
    %v571 = vpop.f32.mrb[0].mxu0
    %v572 = vadd.f32 0.0, %v571
    %v573 = vpop.f32.mrb[0].mxu0
    %574 = vdwg.mxu0
    %v575 = vadd.f32 %v291, %v572
    %576 = vst [vmem:[#allocation2] sm:$0xff] %v575
    // Predicated region
    $region66: #{tpu_custom_call.1} parent=1 // pred_check
      %p577 = pneg %p94
    $region67: #{tpu_custom_call.1} parent=1 // pred_check_branch
      %579 = sbr.rel (%p577) target = $region69
    $region68: #{tpu_custom_call.1} parent=1 // pred_region
      %v580 = vld [vmem:[#allocation2] sm:$0xff]
      %v581 = vld [vmem:[%s2] sm:$0x1]
      %v583 = vlaneseq
      %v584 = vshrl.u32 %v583, 7
      %v585 = vsub.s32 0, %v584
      %v586 = vrot.slane %v581, %v585
      %v588 = vadd.f32 %v580, %v586
      %v589 = vld [vmem:[%s3] sm:$0x1]
      %v590 = vld [vmem:[%s4] sm:$0x1]
      %v591 = vlaneseq
      %v592 = vshrl.u32 %v591, 7
      %vm593 = vcmp.lt.s32.totalorder %v592, 2
      %v594 = vsel %vm593, 1, 0
      %v595 = vcvt.s32.f32 %v594
      %v596 = vmul.f32 %v588, %v595
      %v597 = vrot.slane %v596, 4
      %v598 = vadd.f32 %v596, %v597
      %v599 = vrot.slane %v598, 2
      %v600 = vadd.f32 %v598, %v599
      %v601 = vrot.slane %v600, 1
      %v602 = vadd.f32 %v600, %v601
      %v603 = vmul.f32 %v602, 0.5
      %v604 = vmul.f32 %v596, %v588
      %v605 = vrot.slane %v604, 4
      %v606 = vadd.f32 %v604, %v605
      %v607 = vrot.slane %v606, 2
      %v608 = vadd.f32 %v606, %v607
      %v609 = vrot.slane %v608, 1
      %v610 = vadd.f32 %v608, %v609
      %v611 = vmul.f32 %v610, 0.5
      %v612 = vmul.f32 %v603, %v603
      %v613 = vsub.f32 %v611, %v612
      %v614 = vmax.f32 %v613, 0.0
      %v615 = vsub.f32 %v588, %v603
      %v616 = vadd.f32 %v614, 1e-05
      %v617 = vrsqrt.pop %v616
      %v618 = vmul.f32 %v615, %v617
      %v620 = vlaneseq
      %v621 = vshrl.u32 %v620, 7
      %v622 = vsub.s32 0, %v621
      %v623 = vrot.slane %v589, %v622
      %v625 = vmul.f32 %v618, %v623
      %v627 = vlaneseq
      %v628 = vshrl.u32 %v627, 7
      %v629 = vsub.s32 0, %v628
      %v630 = vrot.slane %v590, %v629
      %v632 = vadd.f32 %v625, %v630
      %v633 = vmin.f32 %v632, 20.0
      %v634 = vmul.f32 %v633, 1.442695
      %v635 = vpow.pop %v634
      %v636 = vadd.f32 %v635, 1.0
      %v637 = vmul.f32 %v636, %v636
      %v638 = vsub.f32 %v637, 1.0
      %v639 = vmul.f32 %v632, %v638
      %v640 = vadd.f32 %v637, 1.0
      %v641 = vrcp.pop %v640
      %v642 = vmul.f32 %v639, %v641
      %v643 = vld [vmem:[#allocation8] sm:$0xff]
      %v644 = vld [vmem:[#allocation8 + $0x8] sm:$0xff]
      %v645 = vld [vmem:[#allocation8 + $0x10] sm:$0xff]
      %v646 = vld [vmem:[#allocation8 + $0x18] sm:$0xff]
      %v647 = vld [vmem:[#allocation8 + $0x20] sm:$0xff]
      %v648 = vld [vmem:[#allocation8 + $0x28] sm:$0xff]
      %v649 = vld [vmem:[#allocation8 + $0x30] sm:$0xff]
      %v650 = vld [vmem:[#allocation8 + $0x38] sm:$0xff]
      %v651 = vld [vmem:[#allocation8 + $0x40] sm:$0xff]
      %v652 = vld [vmem:[#allocation8 + $0x48] sm:$0xff]
      %v653 = vld [vmem:[#allocation8 + $0x50] sm:$0xff]
      %v654 = vld [vmem:[#allocation8 + $0x58] sm:$0xff]
      %v655 = vld [vmem:[#allocation8 + $0x60] sm:$0xff]
      %v656 = vld [vmem:[#allocation8 + $0x68] sm:$0xff]
      %v657 = vld [vmem:[#allocation8 + $0x70] sm:$0xff]
      %v658 = vld [vmem:[#allocation8 + $0x78] sm:$0xff]
      %v659 = vld [vmem:[%s6] sm:$0x1]
      %v661 = vlaneseq
      %v662 = vshrl.u32 %v661, 7
      %v663 = vsub.s32 0, %v662
      %v664 = vrot.slane %v659, %v663
      %666 = vmatprep.subr.mxu0 0.0
      %667 = vmatpush1.msra.mxu0 %v643
      %668 = vmatprep.subr.mxu0 0.0
      %669 = vmatpush1.msra.mxu0 %v644
      %670 = vmatprep.subr.mxu0 0.0
      %671 = vmatpush1.msra.mxu0 %v645
      %672 = vmatprep.subr.mxu0 0.0
      %673 = vmatpush1.msra.mxu0 %v646
      %674 = vmatprep.subr.mxu0 0.0
      %675 = vmatpush1.msra.mxu0 %v647
      %676 = vmatprep.subr.mxu0 0.0
      %677 = vmatpush1.msra.mxu0 %v648
      %678 = vmatprep.subr.mxu0 0.0
      %679 = vmatpush1.msra.mxu0 %v649
      %680 = vmatprep.subr.mxu0 0.0
      %681 = vmatpush1.msra.mxu0 %v650
      %682 = vmatprep.subr.mxu0 0.0
      %683 = vmatpush1.msra.mxu0 %v651
      %684 = vmatprep.subr.mxu0 0.0
      %685 = vmatpush1.msra.mxu0 %v652
      %686 = vmatprep.subr.mxu0 0.0
      %687 = vmatpush1.msra.mxu0 %v653
      %688 = vmatprep.subr.mxu0 0.0
      %689 = vmatpush1.msra.mxu0 %v654
      %690 = vmatprep.subr.mxu0 0.0
      %691 = vmatpush1.msra.mxu0 %v655
      %692 = vmatprep.subr.mxu0 0.0
      %693 = vmatpush1.msra.mxu0 %v656
      %694 = vmatprep.subr.mxu0 0.0
      %695 = vmatpush1.msra.mxu0 %v657
      %696 = vmatprep.subr.mxu0 0.0
      %697 = vmatpush1.msra.mxu0 %v658
      %698 = vmatprep.subr.mxu0 0.0
      %699 = vmatpush1.msra.mxu0 0.0
      %700 = vmatprep.subr.mxu0 0.0
      %701 = vmatpush1.msra.mxu0 0.0
      %702 = vmatprep.subr.mxu0 0.0
      %703 = vmatpush1.msra.mxu0 0.0
      %704 = vmatprep.subr.mxu0 0.0
      %705 = vmatpush1.msra.mxu0 0.0
      %706 = vmatprep.subr.mxu0 0.0
      %707 = vmatpush1.msra.mxu0 0.0
      %708 = vmatprep.subr.mxu0 0.0
      %709 = vmatpush1.msra.mxu0 0.0
      %710 = vmatprep.subr.mxu0 0.0
      %711 = vmatpush1.msra.mxu0 0.0
      %712 = vmatprep.subr.mxu0 0.0
      %713 = vmatpush1.msra.mxu0 0.0
      %714 = vmatprep.subr.mxu0 0.0
      %715 = vmatpush1.msra.mxu0 0.0
      %716 = vmatprep.subr.mxu0 0.0
      %717 = vmatpush1.msra.mxu0 0.0
      %718 = vmatprep.subr.mxu0 0.0
      %719 = vmatpush1.msra.mxu0 0.0
      %720 = vmatprep.subr.mxu0 0.0
      %721 = vmatpush1.msra.mxu0 0.0
      %722 = vmatprep.subr.mxu0 0.0
      %723 = vmatpush1.msra.mxu0 0.0
      %724 = vmatprep.subr.mxu0 0.0
      %725 = vmatpush1.msra.mxu0 0.0
      %726 = vmatprep.subr.mxu0 0.0
      %727 = vmatpush1.msra.mxu0 0.0
      %728 = vmatprep.subr.mxu0 0.0
      %729 = vmatpush1.msra.mxu0 0.0
      %730 = vmatprep.mubr.f32.mxu0 0.0
      %731 = vmatmul.mubr.f32.gmra.mrb[0].mxu0 %v642
      %v732 = vpop.f32.mrb[0].mxu0
      %v733 = vadd.f32 %v664, %v732
      %v734 = vpop.f32.mrb[0].mxu0
      %735 = vdwg.mxu0
      %v736 = vld [vmem:[%s7] sm:$0x1]
      %v737 = vld [vmem:[%s8] sm:$0x1]
      %v738 = vmul.f32 %v733, %v595
      %v739 = vrot.slane %v738, 4
      %v740 = vadd.f32 %v738, %v739
      %v741 = vrot.slane %v740, 2
      %v742 = vadd.f32 %v740, %v741
      %v743 = vrot.slane %v742, 1
      %v744 = vadd.f32 %v742, %v743
      %v745 = vmul.f32 %v744, 0.5
      %v746 = vmul.f32 %v738, %v733
      %v747 = vrot.slane %v746, 4
      %v748 = vadd.f32 %v746, %v747
      %v749 = vrot.slane %v748, 2
      %v750 = vadd.f32 %v748, %v749
      %v751 = vrot.slane %v750, 1
      %v752 = vadd.f32 %v750, %v751
      %v753 = vmul.f32 %v752, 0.5
      %v754 = vmul.f32 %v745, %v745
      %v755 = vsub.f32 %v753, %v754
      %v756 = vmax.f32 %v755, 0.0
      %v757 = vsub.f32 %v733, %v745
      %v758 = vadd.f32 %v756, 1e-05
      %v759 = vrsqrt.pop %v758
      %v760 = vmul.f32 %v757, %v759
      %v762 = vlaneseq
      %v763 = vshrl.u32 %v762, 7
      %v764 = vsub.s32 0, %v763
      %v765 = vrot.slane %v736, %v764
      %v767 = vmul.f32 %v760, %v765
      %v769 = vlaneseq
      %v770 = vshrl.u32 %v769, 7
      %v771 = vsub.s32 0, %v770
      %v772 = vrot.slane %v737, %v771
      %v774 = vadd.f32 %v767, %v772
      %v775 = vmin.f32 %v774, 20.0
      %v776 = vmul.f32 %v775, 1.442695
      %v777 = vpow.pop %v776
      %v778 = vadd.f32 %v777, 1.0
      %v779 = vmul.f32 %v778, %v778
      %v780 = vsub.f32 %v779, 1.0
      %v781 = vmul.f32 %v774, %v780
      %v782 = vadd.f32 %v779, 1.0
      %v783 = vrcp.pop %v782
      %v784 = vmul.f32 %v781, %v783
      %v785 = vld [vmem:[#allocation9] sm:$0xff]
      %v786 = vld [vmem:[#allocation9 + $0x8] sm:$0xff]
      %v787 = vld [vmem:[#allocation9 + $0x10] sm:$0xff]
      %v788 = vld [vmem:[#allocation9 + $0x18] sm:$0xff]
      %v789 = vld [vmem:[#allocation9 + $0x20] sm:$0xff]
      %v790 = vld [vmem:[#allocation9 + $0x28] sm:$0xff]
      %v791 = vld [vmem:[#allocation9 + $0x30] sm:$0xff]
      %v792 = vld [vmem:[#allocation9 + $0x38] sm:$0xff]
      %v793 = vld [vmem:[#allocation9 + $0x40] sm:$0xff]
      %v794 = vld [vmem:[#allocation9 + $0x48] sm:$0xff]
      %v795 = vld [vmem:[#allocation9 + $0x50] sm:$0xff]
      %v796 = vld [vmem:[#allocation9 + $0x58] sm:$0xff]
      %v797 = vld [vmem:[#allocation9 + $0x60] sm:$0xff]
      %v798 = vld [vmem:[#allocation9 + $0x68] sm:$0xff]
      %v799 = vld [vmem:[#allocation9 + $0x70] sm:$0xff]
      %v800 = vld [vmem:[#allocation9 + $0x78] sm:$0xff]
      %v801 = vld [vmem:[%s10] sm:$0x1]
      %v803 = vlaneseq
      %v804 = vshrl.u32 %v803, 7
      %v805 = vsub.s32 0, %v804
      %v806 = vrot.slane %v801, %v805
      %808 = vmatprep.subr.mxu0 0.0
      %809 = vmatpush1.msra.mxu0 %v785
      %810 = vmatprep.subr.mxu0 0.0
      %811 = vmatpush1.msra.mxu0 %v786
      %812 = vmatprep.subr.mxu0 0.0
      %813 = vmatpush1.msra.mxu0 %v787
      %814 = vmatprep.subr.mxu0 0.0
      %815 = vmatpush1.msra.mxu0 %v788
      %816 = vmatprep.subr.mxu0 0.0
      %817 = vmatpush1.msra.mxu0 %v789
      %818 = vmatprep.subr.mxu0 0.0
      %819 = vmatpush1.msra.mxu0 %v790
      %820 = vmatprep.subr.mxu0 0.0
      %821 = vmatpush1.msra.mxu0 %v791
      %822 = vmatprep.subr.mxu0 0.0
      %823 = vmatpush1.msra.mxu0 %v792
      %824 = vmatprep.subr.mxu0 0.0
      %825 = vmatpush1.msra.mxu0 %v793
      %826 = vmatprep.subr.mxu0 0.0
      %827 = vmatpush1.msra.mxu0 %v794
      %828 = vmatprep.subr.mxu0 0.0
      %829 = vmatpush1.msra.mxu0 %v795
      %830 = vmatprep.subr.mxu0 0.0
      %831 = vmatpush1.msra.mxu0 %v796
      %832 = vmatprep.subr.mxu0 0.0
      %833 = vmatpush1.msra.mxu0 %v797
      %834 = vmatprep.subr.mxu0 0.0
      %835 = vmatpush1.msra.mxu0 %v798
      %836 = vmatprep.subr.mxu0 0.0
      %837 = vmatpush1.msra.mxu0 %v799
      %838 = vmatprep.subr.mxu0 0.0
      %839 = vmatpush1.msra.mxu0 %v800
      %840 = vmatprep.subr.mxu0 0.0
      %841 = vmatpush1.msra.mxu0 0.0
      %842 = vmatprep.subr.mxu0 0.0
      %843 = vmatpush1.msra.mxu0 0.0
      %844 = vmatprep.subr.mxu0 0.0
      %845 = vmatpush1.msra.mxu0 0.0
      %846 = vmatprep.subr.mxu0 0.0
      %847 = vmatpush1.msra.mxu0 0.0
      %848 = vmatprep.subr.mxu0 0.0
      %849 = vmatpush1.msra.mxu0 0.0
      %850 = vmatprep.subr.mxu0 0.0
      %851 = vmatpush1.msra.mxu0 0.0
      %852 = vmatprep.subr.mxu0 0.0
      %853 = vmatpush1.msra.mxu0 0.0
      %854 = vmatprep.subr.mxu0 0.0
      %855 = vmatpush1.msra.mxu0 0.0
      %856 = vmatprep.subr.mxu0 0.0
      %857 = vmatpush1.msra.mxu0 0.0
      %858 = vmatprep.subr.mxu0 0.0
      %859 = vmatpush1.msra.mxu0 0.0
      %860 = vmatprep.subr.mxu0 0.0
      %861 = vmatpush1.msra.mxu0 0.0
      %862 = vmatprep.subr.mxu0 0.0
      %863 = vmatpush1.msra.mxu0 0.0
      %864 = vmatprep.subr.mxu0 0.0
      %865 = vmatpush1.msra.mxu0 0.0
      %866 = vmatprep.subr.mxu0 0.0
      %867 = vmatpush1.msra.mxu0 0.0
      %868 = vmatprep.subr.mxu0 0.0
      %869 = vmatpush1.msra.mxu0 0.0
      %870 = vmatprep.subr.mxu0 0.0
      %871 = vmatpush1.msra.mxu0 0.0
      %872 = vmatprep.mubr.f32.mxu0 0.0
      %873 = vmatmul.mubr.f32.gmra.mrb[0].mxu0 %v784
      %v874 = vpop.f32.mrb[0].mxu0
      %v875 = vadd.f32 %v806, %v874
      %v876 = vpop.f32.mrb[0].mxu0
      %877 = vdwg.mxu0
      %878 = vst [vmem:[#allocation11] sm:$0xff] %v875
    $region69: #{tpu_custom_call.1} parent=1 // pred_fallthru
      _
    // Predicated region
    $region70: #{tpu_custom_call.1} parent=1 // pred_check
      _
    $region71: #{tpu_custom_call.1} parent=1 // pred_check_branch
      %880 = sbr.rel (0) target = $region73
    $region72: #{tpu_custom_call.1} parent=1 // pred_region
      %s882 = ssub.s32 128, 128
      %883 = vsyncadd [#allocation5], %s882
      %s885 = sshll.u32 [#allocation11], 4
      %s886 = int_to_ptr.vmem [resolvable:$true] %s885
      %888 = dma.vmem_to_hbm [thread:$0]  %s886, 128, %s11, [#allocation5]
    $region73: #{tpu_custom_call.1} parent=1 // pred_fallthru
      _
    // Predicated region
    $region74: #{tpu_custom_call.1} parent=1 // pred_check
      _
    $region75: #{tpu_custom_call.1} parent=1 // pred_check_branch
      %890 = sbr.rel (0) target = $region77
    $region76: #{tpu_custom_call.1} parent=1 // pred_region
      %891 = dma.done [#allocation5], 128
    $region77: #{tpu_custom_call.1} parent=1 // pred_fallthru
      _
    %892 = vsyncpa [#allocation4], 1
    %893 = vsyncpa [#allocation7], 1
    %894 = vsyncpa [#allocation10], 1
    %895 = vsyncpa [#allocation5], 1

</llo_original>
